<compile_context>
chip_gen: v5e
topology: v5e:2x2
jax: 0.10.0
libtpu: 0.0.40
codegen_flags: <defaults>
</compile_context>

<pallas_src>
import functools

import jax
import jax.numpy as jnp
from jax.experimental import pallas as pl
from jax.experimental.pallas import tpu as pltpu


HIDDEN = 128
NUM_LAYERS = 2      # number of extra (Linear+ReLU+Dropout) blocks
NUM_OUTPUTS = 2
IN_FEATURES = 1

TB = 256            # batch tile: multiple of 8 (sublane) and 256 (MXU M cadence)


def mlp_kernel(x_ref,
               w0_ref, b0_ref,
               w1_ref, b1_ref,
               w2_ref, b2_ref,
               w3_ref, b3_ref,
               o_ref):
    """Fused MLP forward for one batch tile. Weights are VMEM-resident."""
    # Layer 0: Linear(1, H) + ReLU.  K == 1, so a VPU broadcast multiply is
    # exact and avoids a near-empty MXU pass.   (Dropout == identity.)
    x = x_ref[...]                                            # (TB, 1)  f32
    h = jnp.maximum(x * w0_ref[...] + b0_ref[...], 0.0)       # (TB, H)  f32

    # Hidden layer 1: Linear(H, H) + ReLU  (bf16 MXU, f32 accumulate)
    h = jnp.dot(h.astype(jnp.bfloat16), w1_ref[...],
                preferred_element_type=jnp.float32)
    h = jnp.maximum(h + b1_ref[...], 0.0)

    # Hidden layer 2: Linear(H, H) + ReLU
    h = jnp.dot(h.astype(jnp.bfloat16), w2_ref[...],
                preferred_element_type=jnp.float32)
    h = jnp.maximum(h + b2_ref[...], 0.0)

    # Output head: Linear(H, num_outputs), no activation
    out = jnp.dot(h.astype(jnp.bfloat16), w3_ref[...],
                  preferred_element_type=jnp.float32)
    o_ref[...] = (out + b3_ref[...]).astype(o_ref.dtype)


@functools.partial(jax.jit, static_argnames=("tb",))
def mlp_forward(x, params, tb=TB):
    """x: (B, 1) f32.  params: flat tuple (w0,b0,w1,b1,w2,b2,w3,b3)."""
    B = x.shape[0]
    # Pad batch to a multiple of the tile so every grid step writes full rows.
    B_pad = pl.cdiv(B, tb) * tb
    if B_pad != B:
        x = jnp.pad(x, ((0, B_pad - B), (0, 0)))

    resident = lambda i: (0, 0)   # weights/biases: same block every step
    in_specs = [
        pl.BlockSpec((tb, IN_FEATURES), lambda i: (i, 0)),      # x tile
        pl.BlockSpec((IN_FEATURES, HIDDEN), resident),          # w0
        pl.BlockSpec((1, HIDDEN), resident),                    # b0
        pl.BlockSpec((HIDDEN, HIDDEN), resident),               # w1
        pl.BlockSpec((1, HIDDEN), resident),                    # b1
        pl.BlockSpec((HIDDEN, HIDDEN), resident),               # w2
        pl.BlockSpec((1, HIDDEN), resident),                    # b2
        pl.BlockSpec((HIDDEN, NUM_OUTPUTS), resident),          # w3
        pl.BlockSpec((1, NUM_OUTPUTS), resident),               # b3
    ]

    out = pl.pallas_call(
        mlp_kernel,
        out_shape=jax.ShapeDtypeStruct((B_pad, NUM_OUTPUTS), jnp.float32),
        grid=(B_pad // tb,),
        in_specs=in_specs,
        out_specs=pl.BlockSpec((tb, NUM_OUTPUTS), lambda i: (i, 0)),
        compiler_params=pltpu.CompilerParams(
            dimension_semantics=("parallel",)),
    )(x, *params)
    return out[:B]


def init_params(key):
    """Deterministic init mimicking PyTorch's default Linear init
    (uniform(-1/sqrt(fan_in), 1/sqrt(fan_in))).  The 128-wide weights are
    stored in bf16 (MXU fast path); biases and w0 stay f32."""
    def linear(key, fan_in, fan_out, w_dtype):
        kw, kb = jax.random.split(key)
        bound = 1.0 / jnp.sqrt(jnp.float32(fan_in))
        w = jax.random.uniform(kw, (fan_in, fan_out), jnp.float32,
                               minval=-bound, maxval=bound).astype(w_dtype)
        b = jax.random.uniform(kb, (1, fan_out), jnp.float32,
                               minval=-bound, maxval=bound)
        return w, b

    keys = jax.random.split(key, 4)
    w0, b0 = linear(keys[0], IN_FEATURES, HIDDEN, jnp.float32)   # VPU layer
    w1, b1 = linear(keys[1], HIDDEN, HIDDEN, jnp.bfloat16)
    w2, b2 = linear(keys[2], HIDDEN, HIDDEN, jnp.bfloat16)
    w3, b3 = linear(keys[3], HIDDEN, NUM_OUTPUTS, jnp.bfloat16)
    return (w0, b0, w1, b1, w2, b2, w3, b3)


def reference_forward(x, params):
    """Same math/precision as the kernel (bf16 matmul operands, f32 accum)."""
    w0, b0, w1, b1, w2, b2, w3, b3 = params
    h = jnp.maximum(x * w0 + b0, 0.0)
    h = jnp.maximum(jnp.dot(h.astype(jnp.bfloat16), w1,
                            preferred_element_type=jnp.float32) + b1, 0.0)
    h = jnp.maximum(jnp.dot(h.astype(jnp.bfloat16), w2,
                            preferred_element_type=jnp.float32) + b2, 0.0)
    return jnp.dot(h.astype(jnp.bfloat16), w3,
                   preferred_element_type=jnp.float32) + b3


if __name__ == "__main__":
    key = jax.random.PRNGKey(0)
    k_x, k_p = jax.random.split(key)

    B = 512  # two batch tiles of TB=256
    x = jax.random.normal(k_x, (B, IN_FEATURES), jnp.float32)
    params = init_params(k_p)

    out = mlp_forward(x, params)
    out = jax.block_until_ready(out)

    ref = reference_forward(x, params)
    assert out.shape == (B, NUM_OUTPUTS), out.shape
    assert jnp.allclose(out, ref, atol=2e-2, rtol=2e-2), "mismatch vs reference"

    print("KERNEL_OK")
</pallas_src>

<mosaic_0001>
module attributes {stable_mosaic.version = 11 : i64} {
  func.func @mlp_kernel(%arg0: i32, %arg1: memref<256x1xf32, #tpu.memory_space<vmem>>, %arg2: memref<1x128xf32, #tpu.memory_space<vmem>>, %arg3: memref<1x128xf32, #tpu.memory_space<vmem>>, %arg4: memref<128x128xbf16, #tpu.memory_space<vmem>>, %arg5: memref<1x128xf32, #tpu.memory_space<vmem>>, %arg6: memref<128x128xbf16, #tpu.memory_space<vmem>>, %arg7: memref<1x128xf32, #tpu.memory_space<vmem>>, %arg8: memref<128x2xbf16, #tpu.memory_space<vmem>>, %arg9: memref<1x2xf32, #tpu.memory_space<vmem>>, %arg10: memref<256x2xf32, #tpu.memory_space<vmem>>) attributes {dimension_semantics = [#tpu.dimension_semantics<parallel>], iteration_bounds = array<i64: 2>, scalar_prefetch = 0 : i64, scratch_operands = 0 : i64, tpu.core_type = #tpu.core_type<tc>, window_params = [{transform_indices = @transform_0, window_bounds = array<i64: 256, 1>}, {pipeline_mode = #tpu.pipeline_mode<synchronous>, transform_indices = @transform_1, window_bounds = array<i64: 1, 128>}, {pipeline_mode = #tpu.pipeline_mode<synchronous>, transform_indices = @transform_2, window_bounds = array<i64: 1, 128>}, {pipeline_mode = #tpu.pipeline_mode<synchronous>, transform_indices = @transform_3, window_bounds = array<i64: 128, 128>}, {pipeline_mode = #tpu.pipeline_mode<synchronous>, transform_indices = @transform_4, window_bounds = array<i64: 1, 128>}, {pipeline_mode = #tpu.pipeline_mode<synchronous>, transform_indices = @transform_5, window_bounds = array<i64: 128, 128>}, {pipeline_mode = #tpu.pipeline_mode<synchronous>, transform_indices = @transform_6, window_bounds = array<i64: 1, 128>}, {pipeline_mode = #tpu.pipeline_mode<synchronous>, transform_indices = @transform_7, window_bounds = array<i64: 128, 2>}, {pipeline_mode = #tpu.pipeline_mode<synchronous>, transform_indices = @transform_8, window_bounds = array<i64: 1, 2>}, {transform_indices = @transform_9, window_bounds = array<i64: 256, 2>}]} {
    %c0 = arith.constant 0 : index
    %c0_0 = arith.constant 0 : index
    %0 = vector.load %arg1[%c0, %c0_0] : memref<256x1xf32, #tpu.memory_space<vmem>>, vector<256x1xf32>
    %c0_1 = arith.constant 0 : index
    %c0_2 = arith.constant 0 : index
    %1 = vector.load %arg2[%c0_1, %c0_2] : memref<1x128xf32, #tpu.memory_space<vmem>>, vector<1x128xf32>
    %2 = vector.broadcast %0 : vector<256x1xf32> to vector<256x128xf32>
    %3 = vector.broadcast %1 : vector<1x128xf32> to vector<256x128xf32>
    %4 = arith.mulf %2, %3 : vector<256x128xf32>
    %c0_3 = arith.constant 0 : index
    %c0_4 = arith.constant 0 : index
    %5 = vector.load %arg3[%c0_3, %c0_4] : memref<1x128xf32, #tpu.memory_space<vmem>>, vector<1x128xf32>
    %6 = vector.broadcast %5 : vector<1x128xf32> to vector<256x128xf32>
    %7 = arith.addf %4, %6 : vector<256x128xf32>
    %cst = arith.constant 0.000000e+00 : f32
    %8 = vector.broadcast %cst : f32 to vector<256x128xf32>
    %9 = arith.maximumf %7, %8 : vector<256x128xf32>
    %10 = arith.truncf %9 : vector<256x128xf32> to vector<256x128xbf16>
    %c0_5 = arith.constant 0 : index
    %c0_6 = arith.constant 0 : index
    %11 = vector.load %arg4[%c0_5, %c0_6] : memref<128x128xbf16, #tpu.memory_space<vmem>>, vector<128x128xbf16>
    %cst_7 = arith.constant dense<0.000000e+00> : vector<256x128xf32>
    %12 = tpu.matmul %10, %11, %cst_7 {dimension_numbers = #tpu.dot_dimension_numbers<[1], [0], [0], [1], [0, 0, 1, 1], [], []>} : vector<256x128xbf16>, vector<128x128xbf16>, vector<256x128xf32> -> vector<256x128xf32>
    %c0_8 = arith.constant 0 : index
    %c0_9 = arith.constant 0 : index
    %13 = vector.load %arg5[%c0_8, %c0_9] : memref<1x128xf32, #tpu.memory_space<vmem>>, vector<1x128xf32>
    %14 = vector.broadcast %13 : vector<1x128xf32> to vector<256x128xf32>
    %15 = arith.addf %12, %14 : vector<256x128xf32>
    %cst_10 = arith.constant 0.000000e+00 : f32
    %16 = vector.broadcast %cst_10 : f32 to vector<256x128xf32>
    %17 = arith.maximumf %15, %16 : vector<256x128xf32>
    %18 = arith.truncf %17 : vector<256x128xf32> to vector<256x128xbf16>
    %c0_11 = arith.constant 0 : index
    %c0_12 = arith.constant 0 : index
    %19 = vector.load %arg6[%c0_11, %c0_12] : memref<128x128xbf16, #tpu.memory_space<vmem>>, vector<128x128xbf16>
    %cst_13 = arith.constant dense<0.000000e+00> : vector<256x128xf32>
    %20 = tpu.matmul %18, %19, %cst_13 {dimension_numbers = #tpu.dot_dimension_numbers<[1], [0], [0], [1], [0, 0, 1, 1], [], []>} : vector<256x128xbf16>, vector<128x128xbf16>, vector<256x128xf32> -> vector<256x128xf32>
    %c0_14 = arith.constant 0 : index
    %c0_15 = arith.constant 0 : index
    %21 = vector.load %arg7[%c0_14, %c0_15] : memref<1x128xf32, #tpu.memory_space<vmem>>, vector<1x128xf32>
    %22 = vector.broadcast %21 : vector<1x128xf32> to vector<256x128xf32>
    %23 = arith.addf %20, %22 : vector<256x128xf32>
    %cst_16 = arith.constant 0.000000e+00 : f32
    %24 = vector.broadcast %cst_16 : f32 to vector<256x128xf32>
    %25 = arith.maximumf %23, %24 : vector<256x128xf32>
    %26 = arith.truncf %25 : vector<256x128xf32> to vector<256x128xbf16>
    %c0_17 = arith.constant 0 : index
    %c0_18 = arith.constant 0 : index
    %27 = vector.load %arg8[%c0_17, %c0_18] : memref<128x2xbf16, #tpu.memory_space<vmem>>, vector<128x2xbf16>
    %cst_19 = arith.constant dense<0.000000e+00> : vector<256x2xf32>
    %28 = tpu.matmul %26, %27, %cst_19 {dimension_numbers = #tpu.dot_dimension_numbers<[1], [0], [0], [1], [0, 0, 1, 1], [], []>} : vector<256x128xbf16>, vector<128x2xbf16>, vector<256x2xf32> -> vector<256x2xf32>
    %c0_20 = arith.constant 0 : index
    %c0_21 = arith.constant 0 : index
    %29 = vector.load %arg9[%c0_20, %c0_21] : memref<1x2xf32, #tpu.memory_space<vmem>>, vector<1x2xf32>
    %30 = vector.broadcast %29 : vector<1x2xf32> to vector<256x2xf32>
    %31 = arith.addf %28, %30 : vector<256x2xf32>
    %c0_22 = arith.constant 0 : index
    %c0_23 = arith.constant 0 : index
    %32 = vector.load %arg10[%c0_22, %c0_23] : memref<256x2xf32, #tpu.memory_space<vmem>>, vector<256x2xf32>
    tpu.vector_store %arg10[%c0_22, %c0_23], %31 {strides = array<i32>} : memref<256x2xf32, #tpu.memory_space<vmem>>, vector<256x2xf32>,
    return
  }
  func.func @transform_0(%arg0: i32) -> (i32, i32) {
    %c0_i32 = arith.constant 0 : i32
    %c0_i32_0 = arith.constant 0 : i32
    return %arg0, %c0_i32 : i32, i32
  }
  func.func @transform_1(%arg0: i32) -> (i32, i32) {
    %c0_i32 = arith.constant 0 : i32
    %c0_i32_0 = arith.constant 0 : i32
    %c0_i32_1 = arith.constant 0 : i32
    return %c0_i32, %c0_i32_0 : i32, i32
  }
  func.func @transform_2(%arg0: i32) -> (i32, i32) {
    %c0_i32 = arith.constant 0 : i32
    %c0_i32_0 = arith.constant 0 : i32
    %c0_i32_1 = arith.constant 0 : i32
    return %c0_i32, %c0_i32_0 : i32, i32
  }
  func.func @transform_3(%arg0: i32) -> (i32, i32) {
    %c0_i32 = arith.constant 0 : i32
    %c0_i32_0 = arith.constant 0 : i32
    %c0_i32_1 = arith.constant 0 : i32
    return %c0_i32, %c0_i32_0 : i32, i32
  }
  func.func @transform_4(%arg0: i32) -> (i32, i32) {
    %c0_i32 = arith.constant 0 : i32
    %c0_i32_0 = arith.constant 0 : i32
    %c0_i32_1 = arith.constant 0 : i32
    return %c0_i32, %c0_i32_0 : i32, i32
  }
  func.func @transform_5(%arg0: i32) -> (i32, i32) {
    %c0_i32 = arith.constant 0 : i32
    %c0_i32_0 = arith.constant 0 : i32
    %c0_i32_1 = arith.constant 0 : i32
    return %c0_i32, %c0_i32_0 : i32, i32
  }
  func.func @transform_6(%arg0: i32) -> (i32, i32) {
    %c0_i32 = arith.constant 0 : i32
    %c0_i32_0 = arith.constant 0 : i32
    %c0_i32_1 = arith.constant 0 : i32
    return %c0_i32, %c0_i32_0 : i32, i32
  }
  func.func @transform_7(%arg0: i32) -> (i32, i32) {
    %c0_i32 = arith.constant 0 : i32
    %c0_i32_0 = arith.constant 0 : i32
    %c0_i32_1 = arith.constant 0 : i32
    return %c0_i32, %c0_i32_0 : i32, i32
  }
  func.func @transform_8(%arg0: i32) -> (i32, i32) {
    %c0_i32 = arith.constant 0 : i32
    %c0_i32_0 = arith.constant 0 : i32
    %c0_i32_1 = arith.constant 0 : i32
    return %c0_i32, %c0_i32_0 : i32, i32
  }
  func.func @transform_9(%arg0: i32) -> (i32, i32) {
    %c0_i32 = arith.constant 0 : i32
    %c0_i32_0 = arith.constant 0 : i32
    return %arg0, %c0_i32 : i32, i32
  }
}

</mosaic_0001>

<llo_original>
// kernel: mlp_forward.1
$region0: #{mlp_forward.1}
  #allocation0 [shape = 'u32[]', space=smem, size = 0x4, offset = 0x4, fixed_abs, tag = 'smem constant byte address 0x4 - core index']
  #allocation1 [shape = 'u32[72,128]{1,0:T(1,128)}', space=vmem, size = 0x9000, scoped, tag = 'internal scratch']
  %s0 = inlined_call_operand.vmem [shape: f32[512,1], index: 0, kind: input, shape index: {}]
  %s1 = inlined_call_operand.vmem [shape: f32[1,128], index: 1, kind: input, shape index: {}]
  %s2 = inlined_call_operand.vmem [shape: f32[1,128], index: 2, kind: input, shape index: {}]
  %s3 = inlined_call_operand.vmem [shape: bf16[128,128], index: 3, kind: input, shape index: {}]
  %s4 = inlined_call_operand.vmem [shape: f32[1,128], index: 4, kind: input, shape index: {}]
  %s5 = inlined_call_operand.vmem [shape: bf16[128,128], index: 5, kind: input, shape index: {}]
  %s6 = inlined_call_operand.vmem [shape: f32[1,128], index: 6, kind: input, shape index: {}]
  %s7 = inlined_call_operand.vmem [shape: bf16[128,2], index: 7, kind: input, shape index: {}]
  %s8 = inlined_call_operand.vmem [shape: f32[1,2], index: 8, kind: input, shape index: {}]
  %s9 = inlined_call_operand.vmem [shape: f32[512,2], index: 9, kind: output, shape index: {}]
  %s10 = sld [smem:[#allocation0]]
  $region69: #{mlp_forward.1} parent=0
    _
  %s12 = ssub.s32 1, %s10
  %s13 = scalar_select 0, %s12, %s10
  loop: start=0, step=1, limit=4
  $region2: #{mlp_forward.1} parent=0 // loop_pre_header
    _
  $region3: #{mlp_forward.1} parent=0 // loop_header
    %s15 = sphi 0, %s19
    %p16 = scmp.ge.s32.totalorder %s15, 4
    %s25 = sphi 0, %s27
    %s28 = sphi 0, %s25
    %s29 = sphi 0, %s28
    %s45 = sphi 0, %s29
    %s49 = sphi 0, %s49
    %s51 = sphi 0, %s49
    %s52 = sphi 0, %s51
    %s66 = sphi 0, %s52
    %s70 = sphi 0, %s70
    %s72 = sphi 0, %s70
    %s73 = sphi 0, %s72
    %s87 = sphi 0, %s73
    %s91 = sphi 0, %s91
    %s93 = sphi 0, %s91
    %s94 = sphi 0, %s93
    %s108 = sphi 0, %s94
    %s112 = sphi 0, %s112
    %s114 = sphi 0, %s112
    %s115 = sphi 0, %s114
    %s129 = sphi 0, %s115
    %s133 = sphi 0, %s133
    %s135 = sphi 0, %s133
    %s136 = sphi 0, %s135
    %s150 = sphi 0, %s136
    %s154 = sphi 0, %s154
    %s156 = sphi 0, %s154
    %s157 = sphi 0, %s156
    %s171 = sphi 0, %s157
    %s175 = sphi 0, %s175
    %s177 = sphi 0, %s175
    %s178 = sphi 0, %s177
    %s192 = sphi 0, %s178
    %s196 = sphi 0, %s196
    %s198 = sphi 0, %s196
    %s199 = sphi 0, %s198
    %s213 = sphi 0, %s199
    %s219 = sphi 0, %s221
    %s222 = sphi 0, %s219
    %s223 = sphi 0, %s222
    %s239 = sphi 0, %s223
  $region4: #{mlp_forward.1} parent=0 // loop_header_branch
    %18 = sbr.rel (%p16) target = $region8
  $region5: #{mlp_forward.1} parent=0 // loop_body
    %s20 = ssub.s32 %s15, 1
    %s21 = ssub.s32 %s15, 2
    %s22 = sadd.s32 %s15, 1
    %s23 = ssub.s32 %s15, %s22
    %p24 = scmp.eq.s32.totalorder %s23, 0
    %s26 = sadd.s32 %s25, 1
    %s27 = scalar_select %p24, %s25, %s26
    %p30 = pneg %p24
    %p31 = scmp.eq.s32.totalorder %s15, 1
    %p32 = por %p30, %p31
    %p33 = scmp.ne.s32.totalorder %s25, %s28
    %p34 = scmp.eq.s32.totalorder %s15, 0
    %p35 = por %p33, %p34
    %p36 = scmp.ne.s32.totalorder %s25, %s28
    %p37 = scmp.eq.s32.totalorder %s20, 1
    %p38 = por %p36, %p37
    %p39 = scmp.ne.s32.totalorder %s28, %s29
    %p40 = scmp.eq.s32.totalorder %s20, 0
    %p41 = por %p39, %p40
    %p42 = scmp.ne.s32.totalorder %s28, %s29
    %p43 = scmp.eq.s32.totalorder %s21, 1
    %p44 = por %p42, %p43
    %p46 = scmp.ne.s32.totalorder %s29, %s45
    %p47 = scmp.eq.s32.totalorder %s21, 0
    %p48 = por %p46, %p47
    %s50 = sadd.s32 %s49, 1
    %p53 = scmp.eq.s32.totalorder %s15, 1
    %p54 = scmp.ne.s32.totalorder %s49, %s51
    %p55 = scmp.eq.s32.totalorder %s15, 0
    %p56 = por %p54, %p55
    %p57 = scmp.ne.s32.totalorder %s49, %s51
    %p58 = scmp.eq.s32.totalorder %s20, 1
    %p59 = por %p57, %p58
    %p60 = scmp.ne.s32.totalorder %s51, %s52
    %p61 = scmp.eq.s32.totalorder %s20, 0
    %p62 = por %p60, %p61
    %p63 = scmp.ne.s32.totalorder %s51, %s52
    %p64 = scmp.eq.s32.totalorder %s21, 1
    %p65 = por %p63, %p64
    %p67 = scmp.ne.s32.totalorder %s52, %s66
    %p68 = scmp.eq.s32.totalorder %s21, 0
    %p69 = por %p67, %p68
    %s71 = sadd.s32 %s70, 1
    %p74 = scmp.eq.s32.totalorder %s15, 1
    %p75 = scmp.ne.s32.totalorder %s70, %s72
    %p76 = scmp.eq.s32.totalorder %s15, 0
    %p77 = por %p75, %p76
    %p78 = scmp.ne.s32.totalorder %s70, %s72
    %p79 = scmp.eq.s32.totalorder %s20, 1
    %p80 = por %p78, %p79
    %p81 = scmp.ne.s32.totalorder %s72, %s73
    %p82 = scmp.eq.s32.totalorder %s20, 0
    %p83 = por %p81, %p82
    %p84 = scmp.ne.s32.totalorder %s72, %s73
    %p85 = scmp.eq.s32.totalorder %s21, 1
    %p86 = por %p84, %p85
    %p88 = scmp.ne.s32.totalorder %s73, %s87
    %p89 = scmp.eq.s32.totalorder %s21, 0
    %p90 = por %p88, %p89
    %s92 = sadd.s32 %s91, 1
    %p95 = scmp.eq.s32.totalorder %s15, 1
    %p96 = scmp.ne.s32.totalorder %s91, %s93
    %p97 = scmp.eq.s32.totalorder %s15, 0
    %p98 = por %p96, %p97
    %p99 = scmp.ne.s32.totalorder %s91, %s93
    %p100 = scmp.eq.s32.totalorder %s20, 1
    %p101 = por %p99, %p100
    %p102 = scmp.ne.s32.totalorder %s93, %s94
    %p103 = scmp.eq.s32.totalorder %s20, 0
    %p104 = por %p102, %p103
    %p105 = scmp.ne.s32.totalorder %s93, %s94
    %p106 = scmp.eq.s32.totalorder %s21, 1
    %p107 = por %p105, %p106
    %p109 = scmp.ne.s32.totalorder %s94, %s108
    %p110 = scmp.eq.s32.totalorder %s21, 0
    %p111 = por %p109, %p110
    %s113 = sadd.s32 %s112, 1
    %p116 = scmp.eq.s32.totalorder %s15, 1
    %p117 = scmp.ne.s32.totalorder %s112, %s114
    %p118 = scmp.eq.s32.totalorder %s15, 0
    %p119 = por %p117, %p118
    %p120 = scmp.ne.s32.totalorder %s112, %s114
    %p121 = scmp.eq.s32.totalorder %s20, 1
    %p122 = por %p120, %p121
    %p123 = scmp.ne.s32.totalorder %s114, %s115
    %p124 = scmp.eq.s32.totalorder %s20, 0
    %p125 = por %p123, %p124
    %p126 = scmp.ne.s32.totalorder %s114, %s115
    %p127 = scmp.eq.s32.totalorder %s21, 1
    %p128 = por %p126, %p127
    %p130 = scmp.ne.s32.totalorder %s115, %s129
    %p131 = scmp.eq.s32.totalorder %s21, 0
    %p132 = por %p130, %p131
    %s134 = sadd.s32 %s133, 1
    %p137 = scmp.eq.s32.totalorder %s15, 1
    %p138 = scmp.ne.s32.totalorder %s133, %s135
    %p139 = scmp.eq.s32.totalorder %s15, 0
    %p140 = por %p138, %p139
    %p141 = scmp.ne.s32.totalorder %s133, %s135
    %p142 = scmp.eq.s32.totalorder %s20, 1
    %p143 = por %p141, %p142
    %p144 = scmp.ne.s32.totalorder %s135, %s136
    %p145 = scmp.eq.s32.totalorder %s20, 0
    %p146 = por %p144, %p145
    %p147 = scmp.ne.s32.totalorder %s135, %s136
    %p148 = scmp.eq.s32.totalorder %s21, 1
    %p149 = por %p147, %p148
    %p151 = scmp.ne.s32.totalorder %s136, %s150
    %p152 = scmp.eq.s32.totalorder %s21, 0
    %p153 = por %p151, %p152
    %s155 = sadd.s32 %s154, 1
    %p158 = scmp.eq.s32.totalorder %s15, 1
    %p159 = scmp.ne.s32.totalorder %s154, %s156
    %p160 = scmp.eq.s32.totalorder %s15, 0
    %p161 = por %p159, %p160
    %p162 = scmp.ne.s32.totalorder %s154, %s156
    %p163 = scmp.eq.s32.totalorder %s20, 1
    %p164 = por %p162, %p163
    %p165 = scmp.ne.s32.totalorder %s156, %s157
    %p166 = scmp.eq.s32.totalorder %s20, 0
    %p167 = por %p165, %p166
    %p168 = scmp.ne.s32.totalorder %s156, %s157
    %p169 = scmp.eq.s32.totalorder %s21, 1
    %p170 = por %p168, %p169
    %p172 = scmp.ne.s32.totalorder %s157, %s171
    %p173 = scmp.eq.s32.totalorder %s21, 0
    %p174 = por %p172, %p173
    %s176 = sadd.s32 %s175, 1
    %p179 = scmp.eq.s32.totalorder %s15, 1
    %p180 = scmp.ne.s32.totalorder %s175, %s177
    %p181 = scmp.eq.s32.totalorder %s15, 0
    %p182 = por %p180, %p181
    %p183 = scmp.ne.s32.totalorder %s175, %s177
    %p184 = scmp.eq.s32.totalorder %s20, 1
    %p185 = por %p183, %p184
    %p186 = scmp.ne.s32.totalorder %s177, %s178
    %p187 = scmp.eq.s32.totalorder %s20, 0
    %p188 = por %p186, %p187
    %p189 = scmp.ne.s32.totalorder %s177, %s178
    %p190 = scmp.eq.s32.totalorder %s21, 1
    %p191 = por %p189, %p190
    %p193 = scmp.ne.s32.totalorder %s178, %s192
    %p194 = scmp.eq.s32.totalorder %s21, 0
    %p195 = por %p193, %p194
    %s197 = sadd.s32 %s196, 1
    %p200 = scmp.eq.s32.totalorder %s15, 1
    %p201 = scmp.ne.s32.totalorder %s196, %s198
    %p202 = scmp.eq.s32.totalorder %s15, 0
    %p203 = por %p201, %p202
    %p204 = scmp.ne.s32.totalorder %s196, %s198
    %p205 = scmp.eq.s32.totalorder %s20, 1
    %p206 = por %p204, %p205
    %p207 = scmp.ne.s32.totalorder %s198, %s199
    %p208 = scmp.eq.s32.totalorder %s20, 0
    %p209 = por %p207, %p208
    %p210 = scmp.ne.s32.totalorder %s198, %s199
    %p211 = scmp.eq.s32.totalorder %s21, 1
    %p212 = por %p210, %p211
    %p214 = scmp.ne.s32.totalorder %s199, %s213
    %p215 = scmp.eq.s32.totalorder %s21, 0
    %p216 = por %p214, %p215
    %s217 = ssub.s32 %s15, %s22
    %p218 = scmp.eq.s32.totalorder %s217, 0
    %s220 = sadd.s32 %s219, 1
    %s221 = scalar_select %p218, %s219, %s220
    %p224 = pneg %p218
    %p225 = scmp.eq.s32.totalorder %s15, 1
    %p226 = por %p224, %p225
    %p227 = scmp.ne.s32.totalorder %s219, %s222
    %p228 = scmp.eq.s32.totalorder %s15, 0
    %p229 = por %p227, %p228
    %p230 = scmp.ne.s32.totalorder %s219, %s222
    %p231 = scmp.eq.s32.totalorder %s20, 1
    %p232 = por %p230, %p231
    %p233 = scmp.ne.s32.totalorder %s222, %s223
    %p234 = scmp.eq.s32.totalorder %s20, 0
    %p235 = por %p233, %p234
    %p236 = scmp.ne.s32.totalorder %s222, %s223
    %p237 = scmp.eq.s32.totalorder %s21, 1
    %p238 = por %p236, %p237
    %p240 = scmp.ne.s32.totalorder %s223, %s239
    %p241 = scmp.eq.s32.totalorder %s21, 0
    %p242 = por %p240, %p241
    %p243 = scmp.le.s32.totalorder 1, %s15
    %p244 = scmp.lt.s32.totalorder %s15, 3
    %p245 = pnand %p243, %p244
    %p246 = pneg %p245
    // Predicated region
    $region9: #{mlp_forward.1} parent=5 // pred_check
      _
    $region10: #{mlp_forward.1} parent=5 // pred_check_branch
      %248 = sbr.rel (%p245) target = $region12
    $region11: #{mlp_forward.1} parent=5 // pred_region
      %s249 = ssub.s32 %s15, 1
      // Predicated region
      $region13: #{mlp_forward.1} parent=11 // pred_check
        %p250 = pneg %p62
      $region14: #{mlp_forward.1} parent=11 // pred_check_branch
        %252 = sbr.rel (%p250) target = $region16
      $region15: #{mlp_forward.1} parent=11 // pred_region
        _
      $region16: #{mlp_forward.1} parent=11 // pred_fallthru
        _
      // Predicated region
      $region17: #{mlp_forward.1} parent=11 // pred_check
        %p253 = pneg %p83
      $region18: #{mlp_forward.1} parent=11 // pred_check_branch
        %255 = sbr.rel (%p253) target = $region20
      $region19: #{mlp_forward.1} parent=11 // pred_region
        _
      $region20: #{mlp_forward.1} parent=11 // pred_fallthru
        _
      // Predicated region
      $region21: #{mlp_forward.1} parent=11 // pred_check
        %p256 = pneg %p104
      $region22: #{mlp_forward.1} parent=11 // pred_check_branch
        %258 = sbr.rel (%p256) target = $region24
      $region23: #{mlp_forward.1} parent=11 // pred_region
        _
      $region24: #{mlp_forward.1} parent=11 // pred_fallthru
        _
      // Predicated region
      $region25: #{mlp_forward.1} parent=11 // pred_check
        %p259 = pneg %p125
      $region26: #{mlp_forward.1} parent=11 // pred_check_branch
        %261 = sbr.rel (%p259) target = $region28
      $region27: #{mlp_forward.1} parent=11 // pred_region
        _
      $region28: #{mlp_forward.1} parent=11 // pred_fallthru
        _
      // Predicated region
      $region29: #{mlp_forward.1} parent=11 // pred_check
        %p262 = pneg %p146
      $region30: #{mlp_forward.1} parent=11 // pred_check_branch
        %264 = sbr.rel (%p262) target = $region32
      $region31: #{mlp_forward.1} parent=11 // pred_region
        _
      $region32: #{mlp_forward.1} parent=11 // pred_fallthru
        _
      // Predicated region
      $region33: #{mlp_forward.1} parent=11 // pred_check
        %p265 = pneg %p167
      $region34: #{mlp_forward.1} parent=11 // pred_check_branch
        %267 = sbr.rel (%p265) target = $region36
      $region35: #{mlp_forward.1} parent=11 // pred_region
        _
      $region36: #{mlp_forward.1} parent=11 // pred_fallthru
        _
      // Predicated region
      $region37: #{mlp_forward.1} parent=11 // pred_check
        %p268 = pneg %p188
      $region38: #{mlp_forward.1} parent=11 // pred_check_branch
        %270 = sbr.rel (%p268) target = $region40
      $region39: #{mlp_forward.1} parent=11 // pred_region
        _
      $region40: #{mlp_forward.1} parent=11 // pred_fallthru
        _
      // Predicated region
      $region41: #{mlp_forward.1} parent=11 // pred_check
        %p271 = pneg %p209
      $region42: #{mlp_forward.1} parent=11 // pred_check_branch
        %273 = sbr.rel (%p271) target = $region44
      $region43: #{mlp_forward.1} parent=11 // pred_region
        _
      $region44: #{mlp_forward.1} parent=11 // pred_fallthru
        _
    $region12: #{mlp_forward.1} parent=5 // pred_fallthru
      _
    %p274 = scmp.lt.s32.totalorder %s15, 2
    // Predicated region
    $region45: #{mlp_forward.1} parent=5 // pred_check
      %p275 = pneg %p274
    $region46: #{mlp_forward.1} parent=5 // pred_check_branch
      %277 = sbr.rel (%p275) target = $region48
    $region47: #{mlp_forward.1} parent=5 // pred_region
      // Predicated region
      $region49: #{mlp_forward.1} parent=47 // pred_check
        %p278 = pneg %p35
      $region50: #{mlp_forward.1} parent=47 // pred_check_branch
        %280 = sbr.rel (%p278) target = $region52
      $region51: #{mlp_forward.1} parent=47 // pred_region
        %s281 = smul.u32 32, %s15
        %p282 = scmp.lt.s32.totalorder %s281, 63
        %s283 = scalar_select %p282, %s281, 63
        %s284 = smul.addr %s283, 8
        %s285 = scalar_lea.vmem %s0, %s284
        %s286 = smul.u32 32, %s15
      $region52: #{mlp_forward.1} parent=47 // pred_fallthru
        _
    $region48: #{mlp_forward.1} parent=5 // pred_fallthru
      _
    %p287 = scmp.le.s32.totalorder 1, %s15
    %p288 = scmp.lt.s32.totalorder %s15, 3
    %p289 = pnand %p287, %p288
    %p290 = pneg %p289
    // Predicated region
    $region53: #{mlp_forward.1} parent=5 // pred_check
      _
    $region54: #{mlp_forward.1} parent=5 // pred_check_branch
      %292 = sbr.rel (%p289) target = $region56
    $region55: #{mlp_forward.1} parent=5 // pred_region
      %s293 = ssub.s32 %s15, 1
      %s294 = smul.u32 32, %s20
      %p295 = scmp.lt.s32.totalorder %s294, 63
      %s296 = scalar_select %p295, %s294, 63
      %s297 = smul.addr %s296, 8
      %s298 = scalar_lea.vmem %s0, %s297
      %p299 = pneg %p41
      %p300 = pneg %p38
      %p301 = pneg %p62
      %p302 = pneg %p59
      %p303 = pneg %p83
      %p304 = pneg %p80
      %p305 = pneg %p104
      %p306 = pneg %p101
      %p307 = pneg %p125
      %p308 = pneg %p122
      %p309 = pneg %p146
      %p310 = pneg %p143
      %p311 = pneg %p167
      %p312 = pneg %p164
      %p313 = pneg %p188
      %p314 = pneg %p185
      %p315 = pneg %p209
      %p316 = pneg %p206
      %p317 = pneg %p235
      %p318 = pneg %p232
      %s319 = smul.u32 32, %s20
      %p320 = scmp.lt.s32.totalorder %s319, 63
      %s321 = scalar_select %p320, %s319, 63
      %s322 = smul.addr %s321, 8
      %s323 = scalar_lea.vmem %s9, %s322
      %s324 = smul.u32 32, %s20
      %p325 = scmp.lt.s32.totalorder %s324, 63
      %s326 = scalar_select %p325, %s324, 63
      %s327 = smul.addr %s326, 8
      %s328 = scalar_lea.vmem %s0, %s327
      %s329 = smul.u32 32, %s20
      %s330 = smul.u32 32, %s20
      %p331 = scmp.lt.s32.totalorder %s330, 63
      %s332 = scalar_select %p331, %s330, 63
      %s333 = smul.addr %s332, 8
      %s334 = scalar_lea.vmem %s9, %s333
      %s335 = smul.u32 32, %s20
      %v336 = vld [vmem:[%s328] sm:$0xff]
      %v337 = vld [vmem:[%s328 + $0x8] sm:$0xff]
      %v338 = vld [vmem:[%s328 + $0x10] sm:$0xff]
      %v339 = vld [vmem:[%s328 + $0x18] sm:$0xff]
      %v340 = vld [vmem:[%s328 + $0x20] sm:$0xff]
      %v341 = vld [vmem:[%s328 + $0x28] sm:$0xff]
      %v342 = vld [vmem:[%s328 + $0x30] sm:$0xff]
      %v343 = vld [vmem:[%s328 + $0x38] sm:$0xff]
      %v344 = vld [vmem:[%s328 + $0x40] sm:$0xff]
      %v345 = vld [vmem:[%s328 + $0x48] sm:$0xff]
      %v346 = vld [vmem:[%s328 + $0x50] sm:$0xff]
      %v347 = vld [vmem:[%s328 + $0x58] sm:$0xff]
      %v348 = vld [vmem:[%s328 + $0x60] sm:$0xff]
      %v349 = vld [vmem:[%s328 + $0x68] sm:$0xff]
      %v350 = vld [vmem:[%s328 + $0x70] sm:$0xff]
      %v351 = vld [vmem:[%s328 + $0x78] sm:$0xff]
      %v352 = vld [vmem:[%s328 + $0x80] sm:$0xff]
      %v353 = vld [vmem:[%s328 + $0x88] sm:$0xff]
      %v354 = vld [vmem:[%s328 + $0x90] sm:$0xff]
      %v355 = vld [vmem:[%s328 + $0x98] sm:$0xff]
      %v356 = vld [vmem:[%s328 + $0xa0] sm:$0xff]
      %v357 = vld [vmem:[%s328 + $0xa8] sm:$0xff]
      %v358 = vld [vmem:[%s328 + $0xb0] sm:$0xff]
      %v359 = vld [vmem:[%s328 + $0xb8] sm:$0xff]
      %v360 = vld [vmem:[%s328 + $0xc0] sm:$0xff]
      %v361 = vld [vmem:[%s328 + $0xc8] sm:$0xff]
      %v362 = vld [vmem:[%s328 + $0xd0] sm:$0xff]
      %v363 = vld [vmem:[%s328 + $0xd8] sm:$0xff]
      %v364 = vld [vmem:[%s328 + $0xe0] sm:$0xff]
      %v365 = vld [vmem:[%s328 + $0xe8] sm:$0xff]
      %v366 = vld [vmem:[%s328 + $0xf0] sm:$0xff]
      %v367 = vld [vmem:[%s328 + $0xf8] sm:$0xff]
      %v368 = vld [vmem:[%s1] sm:$0x1]
      %370 = vset.pattern.permute.xlu0 0
      %371 = vperm.xlu0 %370, %v336
      %v372 = vpop.permute.xlu0 %371
      %375 = vset.pattern.permute.xlu0 0
      %376 = vperm.xlu0 %375, %v337
      %v377 = vpop.permute.xlu0 %376
      %380 = vset.pattern.permute.xlu0 0
      %381 = vperm.xlu0 %380, %v338
      %v382 = vpop.permute.xlu0 %381
      %385 = vset.pattern.permute.xlu0 0
      %386 = vperm.xlu0 %385, %v339
      %v387 = vpop.permute.xlu0 %386
      %390 = vset.pattern.permute.xlu0 0
      %391 = vperm.xlu0 %390, %v340
      %v392 = vpop.permute.xlu0 %391
      %395 = vset.pattern.permute.xlu0 0
      %396 = vperm.xlu0 %395, %v341
      %v397 = vpop.permute.xlu0 %396
      %400 = vset.pattern.permute.xlu0 0
      %401 = vperm.xlu0 %400, %v342
      %v402 = vpop.permute.xlu0 %401
      %405 = vset.pattern.permute.xlu0 0
      %406 = vperm.xlu0 %405, %v343
      %v407 = vpop.permute.xlu0 %406
      %410 = vset.pattern.permute.xlu0 0
      %411 = vperm.xlu0 %410, %v344
      %v412 = vpop.permute.xlu0 %411
      %415 = vset.pattern.permute.xlu0 0
      %416 = vperm.xlu0 %415, %v345
      %v417 = vpop.permute.xlu0 %416
      %420 = vset.pattern.permute.xlu0 0
      %421 = vperm.xlu0 %420, %v346
      %v422 = vpop.permute.xlu0 %421
      %425 = vset.pattern.permute.xlu0 0
      %426 = vperm.xlu0 %425, %v347
      %v427 = vpop.permute.xlu0 %426
      %430 = vset.pattern.permute.xlu0 0
      %431 = vperm.xlu0 %430, %v348
      %v432 = vpop.permute.xlu0 %431
      %435 = vset.pattern.permute.xlu0 0
      %436 = vperm.xlu0 %435, %v349
      %v437 = vpop.permute.xlu0 %436
      %440 = vset.pattern.permute.xlu0 0
      %441 = vperm.xlu0 %440, %v350
      %v442 = vpop.permute.xlu0 %441
      %445 = vset.pattern.permute.xlu0 0
      %446 = vperm.xlu0 %445, %v351
      %v447 = vpop.permute.xlu0 %446
      %450 = vset.pattern.permute.xlu0 0
      %451 = vperm.xlu0 %450, %v352
      %v452 = vpop.permute.xlu0 %451
      %455 = vset.pattern.permute.xlu0 0
      %456 = vperm.xlu0 %455, %v353
      %v457 = vpop.permute.xlu0 %456
      %460 = vset.pattern.permute.xlu0 0
      %461 = vperm.xlu0 %460, %v354
      %v462 = vpop.permute.xlu0 %461
      %465 = vset.pattern.permute.xlu0 0
      %466 = vperm.xlu0 %465, %v355
      %v467 = vpop.permute.xlu0 %466
      %470 = vset.pattern.permute.xlu0 0
      %471 = vperm.xlu0 %470, %v356
      %v472 = vpop.permute.xlu0 %471
      %475 = vset.pattern.permute.xlu0 0
      %476 = vperm.xlu0 %475, %v357
      %v477 = vpop.permute.xlu0 %476
      %480 = vset.pattern.permute.xlu0 0
      %481 = vperm.xlu0 %480, %v358
      %v482 = vpop.permute.xlu0 %481
      %485 = vset.pattern.permute.xlu0 0
      %486 = vperm.xlu0 %485, %v359
      %v487 = vpop.permute.xlu0 %486
      %490 = vset.pattern.permute.xlu0 0
      %491 = vperm.xlu0 %490, %v360
      %v492 = vpop.permute.xlu0 %491
      %495 = vset.pattern.permute.xlu0 0
      %496 = vperm.xlu0 %495, %v361
      %v497 = vpop.permute.xlu0 %496
      %500 = vset.pattern.permute.xlu0 0
      %501 = vperm.xlu0 %500, %v362
      %v502 = vpop.permute.xlu0 %501
      %505 = vset.pattern.permute.xlu0 0
      %506 = vperm.xlu0 %505, %v363
      %v507 = vpop.permute.xlu0 %506
      %510 = vset.pattern.permute.xlu0 0
      %511 = vperm.xlu0 %510, %v364
      %v512 = vpop.permute.xlu0 %511
      %515 = vset.pattern.permute.xlu0 0
      %516 = vperm.xlu0 %515, %v365
      %v517 = vpop.permute.xlu0 %516
      %520 = vset.pattern.permute.xlu0 0
      %521 = vperm.xlu0 %520, %v366
      %v522 = vpop.permute.xlu0 %521
      %525 = vset.pattern.permute.xlu0 0
      %526 = vperm.xlu0 %525, %v367
      %v527 = vpop.permute.xlu0 %526
      %v530 = vperm.slane %v368, 0
      %v532 = vmul.f32 %v372, %v530
      %v533 = vmul.f32 %v377, %v530
      %v534 = vmul.f32 %v382, %v530
      %v535 = vmul.f32 %v387, %v530
      %v536 = vmul.f32 %v392, %v530
      %v537 = vmul.f32 %v397, %v530
      %v538 = vmul.f32 %v402, %v530
      %v539 = vmul.f32 %v407, %v530
      %v540 = vmul.f32 %v412, %v530
      %v541 = vmul.f32 %v417, %v530
      %v542 = vmul.f32 %v422, %v530
      %v543 = vmul.f32 %v427, %v530
      %v544 = vmul.f32 %v432, %v530
      %v545 = vmul.f32 %v437, %v530
      %v546 = vmul.f32 %v442, %v530
      %v547 = vmul.f32 %v447, %v530
      %v548 = vmul.f32 %v452, %v530
      %v549 = vmul.f32 %v457, %v530
      %v550 = vmul.f32 %v462, %v530
      %v551 = vmul.f32 %v467, %v530
      %v552 = vmul.f32 %v472, %v530
      %v553 = vmul.f32 %v477, %v530
      %v554 = vmul.f32 %v482, %v530
      %v555 = vmul.f32 %v487, %v530
      %v556 = vmul.f32 %v492, %v530
      %v557 = vmul.f32 %v497, %v530
      %v558 = vmul.f32 %v502, %v530
      %v559 = vmul.f32 %v507, %v530
      %v560 = vmul.f32 %v512, %v530
      %v561 = vmul.f32 %v517, %v530
      %v562 = vmul.f32 %v522, %v530
      %v563 = vmul.f32 %v527, %v530
      %v564 = vld [vmem:[%s2] sm:$0x1]
      %v566 = vperm.slane %v564, 0
      %v568 = vadd.f32 %v532, %v566
      %v569 = vadd.f32 %v533, %v566
      %v570 = vadd.f32 %v534, %v566
      %v571 = vadd.f32 %v535, %v566
      %v572 = vadd.f32 %v536, %v566
      %v573 = vadd.f32 %v537, %v566
      %v574 = vadd.f32 %v538, %v566
      %v575 = vadd.f32 %v539, %v566
      %v576 = vadd.f32 %v540, %v566
      %v577 = vadd.f32 %v541, %v566
      %v578 = vadd.f32 %v542, %v566
      %v579 = vadd.f32 %v543, %v566
      %v580 = vadd.f32 %v544, %v566
      %v581 = vadd.f32 %v545, %v566
      %v582 = vadd.f32 %v546, %v566
      %v583 = vadd.f32 %v547, %v566
      %v584 = vadd.f32 %v548, %v566
      %v585 = vadd.f32 %v549, %v566
      %v586 = vadd.f32 %v550, %v566
      %v587 = vadd.f32 %v551, %v566
      %v588 = vadd.f32 %v552, %v566
      %v589 = vadd.f32 %v553, %v566
      %v590 = vadd.f32 %v554, %v566
      %v591 = vadd.f32 %v555, %v566
      %v592 = vadd.f32 %v556, %v566
      %v593 = vadd.f32 %v557, %v566
      %v594 = vadd.f32 %v558, %v566
      %v595 = vadd.f32 %v559, %v566
      %v596 = vadd.f32 %v560, %v566
      %v597 = vadd.f32 %v561, %v566
      %v598 = vadd.f32 %v562, %v566
      %v599 = vadd.f32 %v563, %v566
      %v600 = vmax.f32 %v568, 0.0
      %v601 = vmax.f32 %v569, 0.0
      %v602 = vmax.f32 %v570, 0.0
      %v603 = vmax.f32 %v571, 0.0
      %v604 = vmax.f32 %v572, 0.0
      %v605 = vmax.f32 %v573, 0.0
      %v606 = vmax.f32 %v574, 0.0
      %v607 = vmax.f32 %v575, 0.0
      %v608 = vmax.f32 %v576, 0.0
      %v609 = vmax.f32 %v577, 0.0
      %v610 = vmax.f32 %v578, 0.0
      %v611 = vmax.f32 %v579, 0.0
      %v612 = vmax.f32 %v580, 0.0
      %v613 = vmax.f32 %v581, 0.0
      %v614 = vmax.f32 %v582, 0.0
      %v615 = vmax.f32 %v583, 0.0
      %v616 = vmax.f32 %v584, 0.0
      %v617 = vmax.f32 %v585, 0.0
      %v618 = vmax.f32 %v586, 0.0
      %v619 = vmax.f32 %v587, 0.0
      %v620 = vmax.f32 %v588, 0.0
      %v621 = vmax.f32 %v589, 0.0
      %v622 = vmax.f32 %v590, 0.0
      %v623 = vmax.f32 %v591, 0.0
      %v624 = vmax.f32 %v592, 0.0
      %v625 = vmax.f32 %v593, 0.0
      %v626 = vmax.f32 %v594, 0.0
      %v627 = vmax.f32 %v595, 0.0
      %v628 = vmax.f32 %v596, 0.0
      %v629 = vmax.f32 %v597, 0.0
      %v630 = vmax.f32 %v598, 0.0
      %v631 = vmax.f32 %v599, 0.0
      %v632 = vpack.c.bf16 %v601, %v600
      %v633 = vpack.c.bf16 %v603, %v602
      %v634 = vpack.c.bf16 %v605, %v604
      %v635 = vpack.c.bf16 %v607, %v606
      %v636 = vpack.c.bf16 %v609, %v608
      %v637 = vpack.c.bf16 %v611, %v610
      %v638 = vpack.c.bf16 %v613, %v612
      %v639 = vpack.c.bf16 %v615, %v614
      %v640 = vpack.c.bf16 %v617, %v616
      %v641 = vpack.c.bf16 %v619, %v618
      %v642 = vpack.c.bf16 %v621, %v620
      %v643 = vpack.c.bf16 %v623, %v622
      %v644 = vpack.c.bf16 %v625, %v624
      %v645 = vpack.c.bf16 %v627, %v626
      %v646 = vpack.c.bf16 %v629, %v628
      %v647 = vpack.c.bf16 %v631, %v630
      %v648 = vld [vmem:[%s3] sm:$0xf]
      %v649 = vld [vmem:[%s3 + $0x4] sm:$0xf]
      %v650 = vld [vmem:[%s3 + $0x8] sm:$0xf]
      %v651 = vld [vmem:[%s3 + $0xc] sm:$0xf]
      %v652 = vld [vmem:[%s3 + $0x10] sm:$0xf]
      %v653 = vld [vmem:[%s3 + $0x14] sm:$0xf]
      %v654 = vld [vmem:[%s3 + $0x18] sm:$0xf]
      %v655 = vld [vmem:[%s3 + $0x1c] sm:$0xf]
      %v656 = vld [vmem:[%s3 + $0x20] sm:$0xf]
      %v657 = vld [vmem:[%s3 + $0x24] sm:$0xf]
      %v658 = vld [vmem:[%s3 + $0x28] sm:$0xf]
      %v659 = vld [vmem:[%s3 + $0x2c] sm:$0xf]
      %v660 = vld [vmem:[%s3 + $0x30] sm:$0xf]
      %v661 = vld [vmem:[%s3 + $0x34] sm:$0xf]
      %v662 = vld [vmem:[%s3 + $0x38] sm:$0xf]
      %v663 = vld [vmem:[%s3 + $0x3c] sm:$0xf]
      %v664 = vld [vmem:[%s4] sm:$0x1]
      %v666 = vperm.slane %v664, 0
      %v684 = vunpack.c.l.b16 %v648
      %v685 = vunpack.c.l.b16 %v649
      %v686 = vunpack.c.l.b16 %v650
      %v687 = vunpack.c.l.b16 %v651
      %v688 = vunpack.c.l.b16 %v652
      %v689 = vunpack.c.l.b16 %v653
      %v690 = vunpack.c.l.b16 %v654
      %v691 = vunpack.c.l.b16 %v655
      %v692 = vunpack.c.l.b16 %v656
      %v693 = vunpack.c.l.b16 %v657
      %v694 = vunpack.c.l.b16 %v658
      %v695 = vunpack.c.l.b16 %v659
      %v696 = vunpack.c.l.b16 %v660
      %v697 = vunpack.c.l.b16 %v661
      %v698 = vunpack.c.l.b16 %v662
      %v699 = vunpack.c.l.b16 %v663
      %v700 = vpack.c.b16 %v685, %v684
      %v701 = vpack.c.b16 %v687, %v686
      %v702 = vpack.c.b16 %v689, %v688
      %v703 = vpack.c.b16 %v691, %v690
      %v704 = vpack.c.b16 %v693, %v692
      %v705 = vpack.c.b16 %v695, %v694
      %v706 = vpack.c.b16 %v697, %v696
      %v707 = vpack.c.b16 %v699, %v698
      %716 = vmatpush.bf16.msra.mxu0 %v707
      %717 = vmatpush.bf16.msra.mxu0 %v706
      %718 = vmatpush.bf16.msra.mxu0 %v705
      %719 = vmatpush.bf16.msra.mxu0 %v704
      %720 = vmatpush.bf16.msra.mxu0 %v703
      %721 = vmatpush.bf16.msra.mxu0 %v702
      %722 = vmatpush.bf16.msra.mxu0 %v701
      %723 = vmatpush.bf16.msra.mxu0 %v700
      %724 = vmatmul.bf16.gmra.mxu0 %v632
      %v725 = vpop.f32.mrf.mxu0
      %v726 = vadd.f32 %v666, %v725
      %v727 = vpop.f32.mrf.mxu0
      %v728 = vadd.f32 %v666, %v727
      %729 = vmatmul.bf16.gmra.mxu0 %v633
      %v730 = vpop.f32.mrf.mxu0
      %v731 = vadd.f32 %v666, %v730
      %v732 = vpop.f32.mrf.mxu0
      %v733 = vadd.f32 %v666, %v732
      %734 = vmatmul.bf16.gmra.mxu0 %v634
      %v735 = vpop.f32.mrf.mxu0
      %v736 = vadd.f32 %v666, %v735
      %v737 = vpop.f32.mrf.mxu0
      %v738 = vadd.f32 %v666, %v737
      %739 = vmatmul.bf16.gmra.mxu0 %v635
      %v740 = vpop.f32.mrf.mxu0
      %v741 = vadd.f32 %v666, %v740
      %v742 = vpop.f32.mrf.mxu0
      %v743 = vadd.f32 %v666, %v742
      %744 = vmatmul.bf16.gmra.mxu0 %v636
      %v745 = vpop.f32.mrf.mxu0
      %v746 = vadd.f32 %v666, %v745
      %v747 = vpop.f32.mrf.mxu0
      %v748 = vadd.f32 %v666, %v747
      %749 = vmatmul.bf16.gmra.mxu0 %v637
      %v750 = vpop.f32.mrf.mxu0
      %v751 = vadd.f32 %v666, %v750
      %v752 = vpop.f32.mrf.mxu0
      %v753 = vadd.f32 %v666, %v752
      %754 = vmatmul.bf16.gmra.mxu0 %v638
      %v755 = vpop.f32.mrf.mxu0
      %v756 = vadd.f32 %v666, %v755
      %v757 = vpop.f32.mrf.mxu0
      %v758 = vadd.f32 %v666, %v757
      %759 = vmatmul.bf16.gmra.mxu0 %v639
      %v760 = vpop.f32.mrf.mxu0
      %v761 = vadd.f32 %v666, %v760
      %v762 = vpop.f32.mrf.mxu0
      %v763 = vadd.f32 %v666, %v762
      %764 = vmatmul.bf16.gmra.mxu0 %v640
      %v765 = vpop.f32.mrf.mxu0
      %v766 = vadd.f32 %v666, %v765
      %v767 = vpop.f32.mrf.mxu0
      %v768 = vadd.f32 %v666, %v767
      %769 = vmatmul.bf16.gmra.mxu0 %v641
      %v770 = vpop.f32.mrf.mxu0
      %v771 = vadd.f32 %v666, %v770
      %v772 = vpop.f32.mrf.mxu0
      %v773 = vadd.f32 %v666, %v772
      %774 = vmatmul.bf16.gmra.mxu0 %v642
      %v775 = vpop.f32.mrf.mxu0
      %v776 = vadd.f32 %v666, %v775
      %v777 = vpop.f32.mrf.mxu0
      %v778 = vadd.f32 %v666, %v777
      %779 = vmatmul.bf16.gmra.mxu0 %v643
      %v780 = vpop.f32.mrf.mxu0
      %v781 = vadd.f32 %v666, %v780
      %v782 = vpop.f32.mrf.mxu0
      %v783 = vadd.f32 %v666, %v782
      %784 = vmatmul.bf16.gmra.mxu0 %v644
      %v785 = vpop.f32.mrf.mxu0
      %v786 = vadd.f32 %v666, %v785
      %v787 = vpop.f32.mrf.mxu0
      %v788 = vadd.f32 %v666, %v787
      %789 = vmatmul.bf16.gmra.mxu0 %v645
      %v790 = vpop.f32.mrf.mxu0
      %v791 = vadd.f32 %v666, %v790
      %v792 = vpop.f32.mrf.mxu0
      %v793 = vadd.f32 %v666, %v792
      %794 = vmatmul.bf16.gmra.mxu0 %v646
      %v795 = vpop.f32.mrf.mxu0
      %v796 = vadd.f32 %v666, %v795
      %v797 = vpop.f32.mrf.mxu0
      %v798 = vadd.f32 %v666, %v797
      %799 = vmatmul.bf16.gmra.mxu0 %v647
      %v800 = vpop.f32.mrf.mxu0
      %v801 = vadd.f32 %v666, %v800
      %v802 = vpop.f32.mrf.mxu0
      %v803 = vadd.f32 %v666, %v802
      %804 = vdwg.mxu0
      %v805 = vmax.f32 %v726, 0.0
      %v806 = vmax.f32 %v728, 0.0
      %v807 = vmax.f32 %v731, 0.0
      %v808 = vmax.f32 %v733, 0.0
      %v809 = vmax.f32 %v736, 0.0
      %v810 = vmax.f32 %v738, 0.0
      %v811 = vmax.f32 %v741, 0.0
      %v812 = vmax.f32 %v743, 0.0
      %v813 = vmax.f32 %v746, 0.0
      %v814 = vmax.f32 %v748, 0.0
      %v815 = vmax.f32 %v751, 0.0
      %v816 = vmax.f32 %v753, 0.0
      %v817 = vmax.f32 %v756, 0.0
      %v818 = vmax.f32 %v758, 0.0
      %v819 = vmax.f32 %v761, 0.0
      %v820 = vmax.f32 %v763, 0.0
      %v821 = vmax.f32 %v766, 0.0
      %v822 = vmax.f32 %v768, 0.0
      %v823 = vmax.f32 %v771, 0.0
      %v824 = vmax.f32 %v773, 0.0
      %v825 = vmax.f32 %v776, 0.0
      %v826 = vmax.f32 %v778, 0.0
      %v827 = vmax.f32 %v781, 0.0
      %v828 = vmax.f32 %v783, 0.0
      %v829 = vmax.f32 %v786, 0.0
      %v830 = vmax.f32 %v788, 0.0
      %v831 = vmax.f32 %v791, 0.0
      %v832 = vmax.f32 %v793, 0.0
      %v833 = vmax.f32 %v796, 0.0
      %v834 = vmax.f32 %v798, 0.0
      %v835 = vmax.f32 %v801, 0.0
      %v836 = vmax.f32 %v803, 0.0
      %v837 = vpack.c.bf16 %v806, %v805
      %v838 = vpack.c.bf16 %v808, %v807
      %v839 = vpack.c.bf16 %v810, %v809
      %v840 = vpack.c.bf16 %v812, %v811
      %v841 = vpack.c.bf16 %v814, %v813
      %v842 = vpack.c.bf16 %v816, %v815
      %v843 = vpack.c.bf16 %v818, %v817
      %v844 = vpack.c.bf16 %v820, %v819
      %v845 = vpack.c.bf16 %v822, %v821
      %v846 = vpack.c.bf16 %v824, %v823
      %v847 = vpack.c.bf16 %v826, %v825
      %v848 = vpack.c.bf16 %v828, %v827
      %v849 = vpack.c.bf16 %v830, %v829
      %v850 = vpack.c.bf16 %v832, %v831
      %v851 = vpack.c.bf16 %v834, %v833
      %v852 = vpack.c.bf16 %v836, %v835
      %v853 = vld [vmem:[%s5] sm:$0xf]
      %v854 = vld [vmem:[%s5 + $0x4] sm:$0xf]
      %v855 = vld [vmem:[%s5 + $0x8] sm:$0xf]
      %v856 = vld [vmem:[%s5 + $0xc] sm:$0xf]
      %v857 = vld [vmem:[%s5 + $0x10] sm:$0xf]
      %v858 = vld [vmem:[%s5 + $0x14] sm:$0xf]
      %v859 = vld [vmem:[%s5 + $0x18] sm:$0xf]
      %v860 = vld [vmem:[%s5 + $0x1c] sm:$0xf]
      %v861 = vld [vmem:[%s5 + $0x20] sm:$0xf]
      %v862 = vld [vmem:[%s5 + $0x24] sm:$0xf]
      %v863 = vld [vmem:[%s5 + $0x28] sm:$0xf]
      %v864 = vld [vmem:[%s5 + $0x2c] sm:$0xf]
      %v865 = vld [vmem:[%s5 + $0x30] sm:$0xf]
      %v866 = vld [vmem:[%s5 + $0x34] sm:$0xf]
      %v867 = vld [vmem:[%s5 + $0x38] sm:$0xf]
      %v868 = vld [vmem:[%s5 + $0x3c] sm:$0xf]
      %v869 = vld [vmem:[%s6] sm:$0x1]
      %v871 = vperm.slane %v869, 0
      %v889 = vunpack.c.l.b16 %v853
      %v890 = vunpack.c.l.b16 %v854
      %v891 = vunpack.c.l.b16 %v855
      %v892 = vunpack.c.l.b16 %v856
      %v893 = vunpack.c.l.b16 %v857
      %v894 = vunpack.c.l.b16 %v858
      %v895 = vunpack.c.l.b16 %v859
      %v896 = vunpack.c.l.b16 %v860
      %v897 = vunpack.c.l.b16 %v861
      %v898 = vunpack.c.l.b16 %v862
      %v899 = vunpack.c.l.b16 %v863
      %v900 = vunpack.c.l.b16 %v864
      %v901 = vunpack.c.l.b16 %v865
      %v902 = vunpack.c.l.b16 %v866
      %v903 = vunpack.c.l.b16 %v867
      %v904 = vunpack.c.l.b16 %v868
      %v905 = vpack.c.b16 %v890, %v889
      %v906 = vpack.c.b16 %v892, %v891
      %v907 = vpack.c.b16 %v894, %v893
      %v908 = vpack.c.b16 %v896, %v895
      %v909 = vpack.c.b16 %v898, %v897
      %v910 = vpack.c.b16 %v900, %v899
      %v911 = vpack.c.b16 %v902, %v901
      %v912 = vpack.c.b16 %v904, %v903
      %921 = vmatpush.bf16.msra.mxu0 %v912
      %922 = vmatpush.bf16.msra.mxu0 %v911
      %923 = vmatpush.bf16.msra.mxu0 %v910
      %924 = vmatpush.bf16.msra.mxu0 %v909
      %925 = vmatpush.bf16.msra.mxu0 %v908
      %926 = vmatpush.bf16.msra.mxu0 %v907
      %927 = vmatpush.bf16.msra.mxu0 %v906
      %928 = vmatpush.bf16.msra.mxu0 %v905
      %929 = vmatmul.bf16.gmra.mxu0 %v837
      %v930 = vpop.f32.mrf.mxu0
      %v931 = vadd.f32 %v871, %v930
      %v932 = vpop.f32.mrf.mxu0
      %v933 = vadd.f32 %v871, %v932
      %934 = vmatmul.bf16.gmra.mxu0 %v838
      %v935 = vpop.f32.mrf.mxu0
      %v936 = vadd.f32 %v871, %v935
      %v937 = vpop.f32.mrf.mxu0
      %v938 = vadd.f32 %v871, %v937
      %939 = vmatmul.bf16.gmra.mxu0 %v839
      %v940 = vpop.f32.mrf.mxu0
      %v941 = vadd.f32 %v871, %v940
      %v942 = vpop.f32.mrf.mxu0
      %v943 = vadd.f32 %v871, %v942
      %944 = vmatmul.bf16.gmra.mxu0 %v840
      %v945 = vpop.f32.mrf.mxu0
      %v946 = vadd.f32 %v871, %v945
      %v947 = vpop.f32.mrf.mxu0
      %v948 = vadd.f32 %v871, %v947
      %949 = vmatmul.bf16.gmra.mxu0 %v841
      %v950 = vpop.f32.mrf.mxu0
      %v951 = vadd.f32 %v871, %v950
      %v952 = vpop.f32.mrf.mxu0
      %v953 = vadd.f32 %v871, %v952
      %954 = vmatmul.bf16.gmra.mxu0 %v842
      %v955 = vpop.f32.mrf.mxu0
      %v956 = vadd.f32 %v871, %v955
      %v957 = vpop.f32.mrf.mxu0
      %v958 = vadd.f32 %v871, %v957
      %959 = vmatmul.bf16.gmra.mxu0 %v843
      %v960 = vpop.f32.mrf.mxu0
      %v961 = vadd.f32 %v871, %v960
      %v962 = vpop.f32.mrf.mxu0
      %v963 = vadd.f32 %v871, %v962
      %964 = vmatmul.bf16.gmra.mxu0 %v844
      %v965 = vpop.f32.mrf.mxu0
      %v966 = vadd.f32 %v871, %v965
      %v967 = vpop.f32.mrf.mxu0
      %v968 = vadd.f32 %v871, %v967
      %969 = vmatmul.bf16.gmra.mxu0 %v845
      %v970 = vpop.f32.mrf.mxu0
      %v971 = vadd.f32 %v871, %v970
      %v972 = vpop.f32.mrf.mxu0
      %v973 = vadd.f32 %v871, %v972
      %974 = vmatmul.bf16.gmra.mxu0 %v846
      %v975 = vpop.f32.mrf.mxu0
      %v976 = vadd.f32 %v871, %v975
      %v977 = vpop.f32.mrf.mxu0
      %v978 = vadd.f32 %v871, %v977
      %979 = vmatmul.bf16.gmra.mxu0 %v847
      %v980 = vpop.f32.mrf.mxu0
      %v981 = vadd.f32 %v871, %v980
      %v982 = vpop.f32.mrf.mxu0
      %v983 = vadd.f32 %v871, %v982
      %984 = vmatmul.bf16.gmra.mxu0 %v848
      %v985 = vpop.f32.mrf.mxu0
      %v986 = vadd.f32 %v871, %v985
      %v987 = vpop.f32.mrf.mxu0
      %v988 = vadd.f32 %v871, %v987
      %989 = vmatmul.bf16.gmra.mxu0 %v849
      %v990 = vpop.f32.mrf.mxu0
      %v991 = vadd.f32 %v871, %v990
      %v992 = vpop.f32.mrf.mxu0
      %v993 = vadd.f32 %v871, %v992
      %994 = vmatmul.bf16.gmra.mxu0 %v850
      %v995 = vpop.f32.mrf.mxu0
      %v996 = vadd.f32 %v871, %v995
      %v997 = vpop.f32.mrf.mxu0
      %v998 = vadd.f32 %v871, %v997
      %999 = vmatmul.bf16.gmra.mxu0 %v851
      %v1000 = vpop.f32.mrf.mxu0
      %v1001 = vadd.f32 %v871, %v1000
      %v1002 = vpop.f32.mrf.mxu0
      %v1003 = vadd.f32 %v871, %v1002
      %1004 = vmatmul.bf16.gmra.mxu0 %v852
      %v1005 = vpop.f32.mrf.mxu0
      %v1006 = vadd.f32 %v871, %v1005
      %v1007 = vpop.f32.mrf.mxu0
      %v1008 = vadd.f32 %v871, %v1007
      %1009 = vdwg.mxu0
      %v1010 = vmax.f32 %v931, 0.0
      %v1011 = vmax.f32 %v933, 0.0
      %v1012 = vmax.f32 %v936, 0.0
      %v1013 = vmax.f32 %v938, 0.0
      %v1014 = vmax.f32 %v941, 0.0
      %v1015 = vmax.f32 %v943, 0.0
      %v1016 = vmax.f32 %v946, 0.0
      %v1017 = vmax.f32 %v948, 0.0
      %v1018 = vmax.f32 %v951, 0.0
      %v1019 = vmax.f32 %v953, 0.0
      %v1020 = vmax.f32 %v956, 0.0
      %v1021 = vmax.f32 %v958, 0.0
      %v1022 = vmax.f32 %v961, 0.0
      %v1023 = vmax.f32 %v963, 0.0
      %v1024 = vmax.f32 %v966, 0.0
      %v1025 = vmax.f32 %v968, 0.0
      %v1026 = vmax.f32 %v971, 0.0
      %v1027 = vmax.f32 %v973, 0.0
      %v1028 = vmax.f32 %v976, 0.0
      %v1029 = vmax.f32 %v978, 0.0
      %v1030 = vmax.f32 %v981, 0.0
      %v1031 = vmax.f32 %v983, 0.0
      %v1032 = vmax.f32 %v986, 0.0
      %v1033 = vmax.f32 %v988, 0.0
      %v1034 = vmax.f32 %v991, 0.0
      %v1035 = vmax.f32 %v993, 0.0
      %v1036 = vmax.f32 %v996, 0.0
      %v1037 = vmax.f32 %v998, 0.0
      %v1038 = vmax.f32 %v1001, 0.0
      %v1039 = vmax.f32 %v1003, 0.0
      %v1040 = vmax.f32 %v1006, 0.0
      %v1041 = vmax.f32 %v1008, 0.0
      %v1042 = vpack.c.bf16 %v1011, %v1010
      %v1043 = vpack.c.bf16 %v1013, %v1012
      %v1044 = vpack.c.bf16 %v1015, %v1014
      %v1045 = vpack.c.bf16 %v1017, %v1016
      %v1046 = vpack.c.bf16 %v1019, %v1018
      %v1047 = vpack.c.bf16 %v1021, %v1020
      %v1048 = vpack.c.bf16 %v1023, %v1022
      %v1049 = vpack.c.bf16 %v1025, %v1024
      %v1050 = vpack.c.bf16 %v1027, %v1026
      %v1051 = vpack.c.bf16 %v1029, %v1028
      %v1052 = vpack.c.bf16 %v1031, %v1030
      %v1053 = vpack.c.bf16 %v1033, %v1032
      %v1054 = vpack.c.bf16 %v1035, %v1034
      %v1055 = vpack.c.bf16 %v1037, %v1036
      %v1056 = vpack.c.bf16 %v1039, %v1038
      %v1057 = vpack.c.bf16 %v1041, %v1040
      %v1058 = vld [vmem:[%s7] sm:$0xf]
      %v1059 = vld [vmem:[%s7 + $0x4] sm:$0xf]
      %v1060 = vld [vmem:[%s7 + $0x8] sm:$0xf]
      %v1061 = vld [vmem:[%s7 + $0xc] sm:$0xf]
      %v1062 = vld [vmem:[%s7 + $0x10] sm:$0xf]
      %v1063 = vld [vmem:[%s7 + $0x14] sm:$0xf]
      %v1064 = vld [vmem:[%s7 + $0x18] sm:$0xf]
      %v1065 = vld [vmem:[%s7 + $0x1c] sm:$0xf]
      %v1066 = vld [vmem:[%s7 + $0x20] sm:$0xf]
      %v1067 = vld [vmem:[%s7 + $0x24] sm:$0xf]
      %v1068 = vld [vmem:[%s7 + $0x28] sm:$0xf]
      %v1069 = vld [vmem:[%s7 + $0x2c] sm:$0xf]
      %v1070 = vld [vmem:[%s7 + $0x30] sm:$0xf]
      %v1071 = vld [vmem:[%s7 + $0x34] sm:$0xf]
      %v1072 = vld [vmem:[%s7 + $0x38] sm:$0xf]
      %v1073 = vld [vmem:[%s7 + $0x3c] sm:$0xf]
      %v1074 = vld [vmem:[%s8] sm:$0x1]
      %v1076 = vperm.slane %v1074, 0
      %v1094 = vunpack.c.l.b16 %v1058
      %v1095 = vunpack.c.l.b16 %v1059
      %v1096 = vunpack.c.l.b16 %v1060
      %v1097 = vunpack.c.l.b16 %v1061
      %v1098 = vunpack.c.l.b16 %v1062
      %v1099 = vunpack.c.l.b16 %v1063
      %v1100 = vunpack.c.l.b16 %v1064
      %v1101 = vunpack.c.l.b16 %v1065
      %v1102 = vunpack.c.l.b16 %v1066
      %v1103 = vunpack.c.l.b16 %v1067
      %v1104 = vunpack.c.l.b16 %v1068
      %v1105 = vunpack.c.l.b16 %v1069
      %v1106 = vunpack.c.l.b16 %v1070
      %v1107 = vunpack.c.l.b16 %v1071
      %v1108 = vunpack.c.l.b16 %v1072
      %v1109 = vunpack.c.l.b16 %v1073
      %v1110 = vpack.c.b16 %v1095, %v1094
      %v1111 = vpack.c.b16 %v1097, %v1096
      %v1112 = vpack.c.b16 %v1099, %v1098
      %v1113 = vpack.c.b16 %v1101, %v1100
      %v1114 = vpack.c.b16 %v1103, %v1102
      %v1115 = vpack.c.b16 %v1105, %v1104
      %v1116 = vpack.c.b16 %v1107, %v1106
      %v1117 = vpack.c.b16 %v1109, %v1108
      %1126 = vmatpush.bf16.msra.mxu0 %v1117
      %1127 = vmatpush.bf16.msra.mxu0 %v1116
      %1128 = vmatpush.bf16.msra.mxu0 %v1115
      %1129 = vmatpush.bf16.msra.mxu0 %v1114
      %1130 = vmatpush.bf16.msra.mxu0 %v1113
      %1131 = vmatpush.bf16.msra.mxu0 %v1112
      %1132 = vmatpush.bf16.msra.mxu0 %v1111
      %1133 = vmatpush.bf16.msra.mxu0 %v1110
      %1134 = vmatmul.bf16.gmra.mxu0 %v1042
      %v1135 = vpop.f32.mrf.mxu0
      %v1136 = vadd.f32 %v1076, %v1135
      %v1137 = vpop.f32.mrf.mxu0
      %v1138 = vadd.f32 %v1076, %v1137
      %1139 = vmatmul.bf16.gmra.mxu0 %v1043
      %v1140 = vpop.f32.mrf.mxu0
      %v1141 = vadd.f32 %v1076, %v1140
      %v1142 = vpop.f32.mrf.mxu0
      %v1143 = vadd.f32 %v1076, %v1142
      %1144 = vmatmul.bf16.gmra.mxu0 %v1044
      %v1145 = vpop.f32.mrf.mxu0
      %v1146 = vadd.f32 %v1076, %v1145
      %v1147 = vpop.f32.mrf.mxu0
      %v1148 = vadd.f32 %v1076, %v1147
      %1149 = vmatmul.bf16.gmra.mxu0 %v1045
      %v1150 = vpop.f32.mrf.mxu0
      %v1151 = vadd.f32 %v1076, %v1150
      %v1152 = vpop.f32.mrf.mxu0
      %v1153 = vadd.f32 %v1076, %v1152
      %1154 = vmatmul.bf16.gmra.mxu0 %v1046
      %v1155 = vpop.f32.mrf.mxu0
      %v1156 = vadd.f32 %v1076, %v1155
      %v1157 = vpop.f32.mrf.mxu0
      %v1158 = vadd.f32 %v1076, %v1157
      %1159 = vmatmul.bf16.gmra.mxu0 %v1047
      %v1160 = vpop.f32.mrf.mxu0
      %v1161 = vadd.f32 %v1076, %v1160
      %v1162 = vpop.f32.mrf.mxu0
      %v1163 = vadd.f32 %v1076, %v1162
      %1164 = vmatmul.bf16.gmra.mxu0 %v1048
      %v1165 = vpop.f32.mrf.mxu0
      %v1166 = vadd.f32 %v1076, %v1165
      %v1167 = vpop.f32.mrf.mxu0
      %v1168 = vadd.f32 %v1076, %v1167
      %1169 = vmatmul.bf16.gmra.mxu0 %v1049
      %v1170 = vpop.f32.mrf.mxu0
      %v1171 = vadd.f32 %v1076, %v1170
      %v1172 = vpop.f32.mrf.mxu0
      %v1173 = vadd.f32 %v1076, %v1172
      %1174 = vmatmul.bf16.gmra.mxu0 %v1050
      %v1175 = vpop.f32.mrf.mxu0
      %v1176 = vadd.f32 %v1076, %v1175
      %v1177 = vpop.f32.mrf.mxu0
      %v1178 = vadd.f32 %v1076, %v1177
      %1179 = vmatmul.bf16.gmra.mxu0 %v1051
      %v1180 = vpop.f32.mrf.mxu0
      %v1181 = vadd.f32 %v1076, %v1180
      %v1182 = vpop.f32.mrf.mxu0
      %v1183 = vadd.f32 %v1076, %v1182
      %1184 = vmatmul.bf16.gmra.mxu0 %v1052
      %v1185 = vpop.f32.mrf.mxu0
      %v1186 = vadd.f32 %v1076, %v1185
      %v1187 = vpop.f32.mrf.mxu0
      %v1188 = vadd.f32 %v1076, %v1187
      %1189 = vmatmul.bf16.gmra.mxu0 %v1053
      %v1190 = vpop.f32.mrf.mxu0
      %v1191 = vadd.f32 %v1076, %v1190
      %v1192 = vpop.f32.mrf.mxu0
      %v1193 = vadd.f32 %v1076, %v1192
      %1194 = vmatmul.bf16.gmra.mxu0 %v1054
      %v1195 = vpop.f32.mrf.mxu0
      %v1196 = vadd.f32 %v1076, %v1195
      %v1197 = vpop.f32.mrf.mxu0
      %v1198 = vadd.f32 %v1076, %v1197
      %1199 = vmatmul.bf16.gmra.mxu0 %v1055
      %v1200 = vpop.f32.mrf.mxu0
      %v1201 = vadd.f32 %v1076, %v1200
      %v1202 = vpop.f32.mrf.mxu0
      %v1203 = vadd.f32 %v1076, %v1202
      %1204 = vmatmul.bf16.gmra.mxu0 %v1056
      %v1205 = vpop.f32.mrf.mxu0
      %v1206 = vadd.f32 %v1076, %v1205
      %v1207 = vpop.f32.mrf.mxu0
      %v1208 = vadd.f32 %v1076, %v1207
      %1209 = vmatmul.bf16.gmra.mxu0 %v1057
      %v1210 = vpop.f32.mrf.mxu0
      %v1211 = vadd.f32 %v1076, %v1210
      %v1212 = vpop.f32.mrf.mxu0
      %v1213 = vadd.f32 %v1076, %v1212
      %1214 = vdwg.mxu0
      %vm1215 = vcmask 15360
      %1216 = vst.msk [vmem:[%s334] sm:$0xff] %vm1215, %v1136
      %1217 = vst.msk [vmem:[%s334 + $0x8] sm:$0xff] %vm1215, %v1138
      %1218 = vst.msk [vmem:[%s334 + $0x10] sm:$0xff] %vm1215, %v1141
      %1219 = vst.msk [vmem:[%s334 + $0x18] sm:$0xff] %vm1215, %v1143
      %1220 = vst.msk [vmem:[%s334 + $0x20] sm:$0xff] %vm1215, %v1146
      %1221 = vst.msk [vmem:[%s334 + $0x28] sm:$0xff] %vm1215, %v1148
      %1222 = vst.msk [vmem:[%s334 + $0x30] sm:$0xff] %vm1215, %v1151
      %1223 = vst.msk [vmem:[%s334 + $0x38] sm:$0xff] %vm1215, %v1153
      %1224 = vst.msk [vmem:[%s334 + $0x40] sm:$0xff] %vm1215, %v1156
      %1225 = vst.msk [vmem:[%s334 + $0x48] sm:$0xff] %vm1215, %v1158
      %1226 = vst.msk [vmem:[%s334 + $0x50] sm:$0xff] %vm1215, %v1161
      %1227 = vst.msk [vmem:[%s334 + $0x58] sm:$0xff] %vm1215, %v1163
      %1228 = vst.msk [vmem:[%s334 + $0x60] sm:$0xff] %vm1215, %v1166
      %1229 = vst.msk [vmem:[%s334 + $0x68] sm:$0xff] %vm1215, %v1168
      %1230 = vst.msk [vmem:[%s334 + $0x70] sm:$0xff] %vm1215, %v1171
      %1231 = vst.msk [vmem:[%s334 + $0x78] sm:$0xff] %vm1215, %v1173
      %1232 = vst.msk [vmem:[%s334 + $0x80] sm:$0xff] %vm1215, %v1176
      %1233 = vst.msk [vmem:[%s334 + $0x88] sm:$0xff] %vm1215, %v1178
      %1234 = vst.msk [vmem:[%s334 + $0x90] sm:$0xff] %vm1215, %v1181
      %1235 = vst.msk [vmem:[%s334 + $0x98] sm:$0xff] %vm1215, %v1183
      %1236 = vst.msk [vmem:[%s334 + $0xa0] sm:$0xff] %vm1215, %v1186
      %1237 = vst.msk [vmem:[%s334 + $0xa8] sm:$0xff] %vm1215, %v1188
      %1238 = vst.msk [vmem:[%s334 + $0xb0] sm:$0xff] %vm1215, %v1191
      %1239 = vst.msk [vmem:[%s334 + $0xb8] sm:$0xff] %vm1215, %v1193
      %1240 = vst.msk [vmem:[%s334 + $0xc0] sm:$0xff] %vm1215, %v1196
      %1241 = vst.msk [vmem:[%s334 + $0xc8] sm:$0xff] %vm1215, %v1198
      %1242 = vst.msk [vmem:[%s334 + $0xd0] sm:$0xff] %vm1215, %v1201
      %1243 = vst.msk [vmem:[%s334 + $0xd8] sm:$0xff] %vm1215, %v1203
      %1244 = vst.msk [vmem:[%s334 + $0xe0] sm:$0xff] %vm1215, %v1206
      %1245 = vst.msk [vmem:[%s334 + $0xe8] sm:$0xff] %vm1215, %v1208
      %1246 = vst.msk [vmem:[%s334 + $0xf0] sm:$0xff] %vm1215, %v1211
      %1247 = vst.msk [vmem:[%s334 + $0xf8] sm:$0xff] %vm1215, %v1213
      %s1248 = smul.u32 32, %s20
      %p1249 = scmp.lt.s32.totalorder %s1248, 63
      %s1250 = scalar_select %p1249, %s1248, 63
      %s1251 = smul.addr %s1250, 8
      %s1252 = scalar_lea.vmem %s9, %s1251
      // Predicated region
      $region57: #{mlp_forward.1} parent=55 // pred_check
        %p1253 = pneg %p232
      $region58: #{mlp_forward.1} parent=55 // pred_check_branch
        %1255 = sbr.rel (%p1253) target = $region60
      $region59: #{mlp_forward.1} parent=55 // pred_region
        %s1256 = smul.u32 32, %s20
      $region60: #{mlp_forward.1} parent=55 // pred_fallthru
        _
    $region56: #{mlp_forward.1} parent=5 // pred_fallthru
      _
    %p1257 = scmp.le.s32.totalorder 2, %s15
    // Predicated region
    $region61: #{mlp_forward.1} parent=5 // pred_check
      %p1258 = pneg %p1257
    $region62: #{mlp_forward.1} parent=5 // pred_check_branch
      %1260 = sbr.rel (%p1258) target = $region64
    $region63: #{mlp_forward.1} parent=5 // pred_region
      %s1261 = ssub.s32 %s15, 2
      // Predicated region
      $region65: #{mlp_forward.1} parent=63 // pred_check
        %p1262 = pneg %p238
      $region66: #{mlp_forward.1} parent=63 // pred_check_branch
        %1264 = sbr.rel (%p1262) target = $region68
      $region67: #{mlp_forward.1} parent=63 // pred_region
        %s1265 = smul.u32 32, %s21
        %p1266 = scmp.lt.s32.totalorder %s1265, 63
        %s1267 = scalar_select %p1266, %s1265, 63
        %s1268 = smul.addr %s1267, 8
        %s1269 = scalar_lea.vmem %s9, %s1268
      $region68: #{mlp_forward.1} parent=63 // pred_fallthru
        _
    $region64: #{mlp_forward.1} parent=5 // pred_fallthru
      _
  $region6: #{mlp_forward.1} parent=0 // loop_footer
    %s19 = sadd.s32 1, %s15
  $region7: #{mlp_forward.1} parent=0 // loop_footer_branch
    %14 = sbr.rel target = $region3
  $region8: #{mlp_forward.1} parent=0 // loop_exit
    _

</llo_original>
